<compile_context>
chip_gen: v5e
topology: v5e:2x2
jax: 0.10.0
libtpu: 0.0.40
codegen_flags: <defaults>
</compile_context>

<pallas_src>
from functools import lru_cache

import numpy as np
import jax
import jax.numpy as jnp
from jax import lax
from jax.experimental import pallas as pl
from jax.experimental.pallas import tpu as pltpu

QUALITY = 75  # matches ApplyJPEGCompression(quality=75)

# Standard JPEG (Annex K) base quantization tables.
_LUMA_Q = np.array(
    [16, 11, 10, 16, 24, 40, 51, 61,
     12, 12, 14, 19, 26, 58, 60, 55,
     14, 13, 16, 24, 40, 57, 69, 56,
     14, 17, 22, 29, 51, 87, 80, 62,
     18, 22, 37, 56, 68, 109, 103, 77,
     24, 35, 55, 64, 81, 104, 113, 92,
     49, 64, 78, 87, 103, 121, 120, 101,
     72, 92, 95, 98, 112, 100, 103, 99], np.float32).reshape(8, 8)
_CHROMA_Q = np.array(
    [17, 18, 24, 47, 99, 99, 99, 99,
     18, 21, 26, 66, 99, 99, 99, 99,
     24, 26, 56, 99, 99, 99, 99, 99,
     47, 66, 99, 99, 99, 99, 99, 99,
     99, 99, 99, 99, 99, 99, 99, 99,
     99, 99, 99, 99, 99, 99, 99, 99,
     99, 99, 99, 99, 99, 99, 99, 99,
     99, 99, 99, 99, 99, 99, 99, 99], np.float32).reshape(8, 8)

# JFIF RGB <-> YCbCr (full range) -- used by the pure-JAX reference.
_RGB2YCC = np.array([[0.299, 0.587, 0.114],
                     [-0.168736, -0.331264, 0.5],
                     [0.5, -0.418688, -0.081312]], np.float32)
_YCC2RGB = np.array([[1.0, 0.0, 1.402],
                     [1.0, -0.344136, -0.714136],
                     [1.0, 1.772, 0.0]], np.float32)
_YCC_OFF = np.array([0.0, 128.0, 128.0], np.float32)


def _dct8_matrix():
    """Orthonormal 8-point DCT-II matrix (matches the JPEG FDCT normalization)."""
    k = np.arange(8, dtype=np.float64)[:, None]
    x = np.arange(8, dtype=np.float64)[None, :]
    c = np.where(k == 0, np.sqrt(1.0 / 8.0), 0.5)
    return (c * np.cos((2.0 * x + 1.0) * k * np.pi / 16.0)).astype(np.float32)


def _quality_scaled_tables(quality):
    """libjpeg-style quality scaling of the base quantization tables."""
    quality = int(np.clip(quality, 1, 100))
    scale = (5000 // quality) if quality < 50 else (200 - 2 * quality)

    def s(t):
        q = (t.astype(np.int64) * scale + 50) // 100
        return np.clip(q, 1, 255).astype(np.float32)

    return s(_LUMA_Q), s(_CHROMA_Q)


@lru_cache(maxsize=16)
def _device_constants(h, w, quality):
    """Device-resident constants, cached per (H, W, quality) across calls."""
    d8 = _dct8_matrix()
    dh = np.kron(np.eye(h // 8, dtype=np.float32), d8)            # (H, H) block-diag DCT
    dw = np.kron(np.eye(w // 8, dtype=np.float32), d8)            # (W, W) block-diag DCT
    ql, qc = _quality_scaled_tables(quality)
    qt = np.stack([np.tile(t, (h // 8, w // 8)) for t in (ql, qc, qc)]).astype(np.float32)
    qit = (1.0 / qt).astype(np.float32)
    return (jnp.asarray(dh), jnp.asarray(dw), jnp.asarray(qt), jnp.asarray(qit))


def _vmem_limit_bytes():
    """Per-generation scoped-VMEM limit (v7x has 64 MiB/TC; older chips 128 MiB)."""
    try:
        kind = jax.devices()[0].device_kind.lower()
    except Exception:
        kind = ""
    if "7" in kind:
        return 48 * 1024 * 1024
    return 96 * 1024 * 1024


def _choose_tb(n, h, w, vmem_limit):
    """Images per grid step, accounting for resident constants and live f32 copies."""
    plane3 = 3 * h * w * 4                                         # one 3-channel f32 image
    # DCT matrices + q/qi maps, double-buffered by the Pallas pipeline.
    const_bytes = 2 * ((h * h + w * w) * 4 + 2 * 3 * h * w * 4)
    # in/out pipeline buffers (2x2) + ~6 live f32 stacks in the body + DH broadcast.
    per_img = plane3 * 10 + 3 * h * h * 4
    budget = vmem_limit - const_bytes - (4 << 20)                  # headroom for Mosaic scratch
    tb = int(max(1, min(n, budget // per_img)))
    if n >= 2:                                                     # >= 2 grid steps -> v7x megacore can split
        tb = min(tb, (n + 1) // 2)
    # Prefer a nearby divisor of n (no ragged edge block) without collapsing to 1.
    for d in range(tb, max(1, tb // 2), -1):
        if n % d == 0:
            return d
    return tb                                                      # ragged edge handled by cdiv grid


def _jpeg_block_kernel(x_ref, dh_ref, dw_ref, qt_ref, qit_ref, o_ref):
    """Fused lossy-JPEG round trip on a (tb, 3, H, W) RGB block."""
    tb, _, H, W = x_ref.shape
    B3 = 3 * tb
    f32 = jnp.float32

    dh = dh_ref[...]                  # (H, H) block-diag 8-point DCT
    dw = dw_ref[...]                  # (W, W)
    qt = qt_ref[...][:, None]         # (3, 1, H, W) quant step per channel
    qit = qit_ref[...][:, None]       # (3, 1, H, W) reciprocal quant step

    x = x_ref[...].astype(f32)        # (tb, 3, H, W) RGB in [0, 255]
    r, g, b = x[:, 0], x[:, 1], x[:, 2]

    # RGB -> YCbCr with the JPEG -128 level shift folded in (the +128 chroma
    # offset cancels against the level shift).  Pure VPU work.
    y = 0.299 * r + 0.587 * g + 0.114 * b - 128.0
    cb = -0.168736 * r - 0.331264 * g + 0.5 * b
    cr = 0.5 * r - 0.418688 * g - 0.081312 * b
    s = jnp.concatenate([y, cb, cr], axis=0)                       # (3*tb, H, W), channel-major

    dh_b = jnp.broadcast_to(dh, (B3, H, H))

    # Forward 8x8 block DCT:  C = DH @ S @ DW^T
    #   W-side as ONE lane-dense 2-D matmul with M = 3*tb*H (S @ DW^T):
    a1 = lax.dot_general(s.reshape(B3 * H, W), dw,
                         (((1,), (1,)), ((), ())),
                         preferred_element_type=f32).reshape(B3, H, W)
    #   H-side as a batched matmul over the 3*tb stack (DH @ .):
    coef = lax.dot_general(dh_b, a1, (((2,), (1,)), ((0,), (0,))),
                           preferred_element_type=f32)             # (B3, H, W)

    # Quantize / dequantize with the per-channel tiled tables.
    deq = (jnp.round(coef.reshape(3, tb, H, W) * qit) * qt).reshape(B3, H, W)

    # Inverse:  S_rec = DH^T @ Cq @ DW
    #   H-side: contract the coefficient index on both operands (DH^T @ .):
    m = lax.dot_general(dh_b, deq, (((1,), (1,)), ((0,), (0,))),
                        preferred_element_type=f32)                # (B3, H, W)
    #   W-side as one big plain 2-D matmul (. @ DW):
    rec = jnp.dot(m.reshape(B3 * H, W), dw,
                  preferred_element_type=f32).reshape(3, tb, H, W)

    # Decoder-side clamp in YCbCr space, then YCbCr -> RGB, round, clamp.
    y_r = jnp.clip(rec[0] + 128.0, 0.0, 255.0)
    cb_r = jnp.clip(rec[1] + 128.0, 0.0, 255.0) - 128.0
    cr_r = jnp.clip(rec[2] + 128.0, 0.0, 255.0) - 128.0

    r_o = y_r + 1.402 * cr_r
    g_o = y_r - 0.344136 * cb_r - 0.714136 * cr_r
    b_o = y_r + 1.772 * cb_r
    out = jnp.stack([r_o, g_o, b_o], axis=1)                       # (tb, 3, H, W)
    o_ref[...] = jnp.clip(jnp.round(out), 0.0, 255.0).astype(o_ref.dtype)


def apply_jpeg_compression(img, quality=QUALITY, tb=None):
    """img: (N, 3, H, W) RGB array in [0, 255].  Returns the same shape/dtype."""
    N, C, H, W = img.shape
    assert C == 3, "expects RGB input of shape (N, 3, H, W)"
    assert H % 8 == 0 and W % 8 == 0, "H, W must be multiples of 8 (JPEG block size)"
    # TODO(synk): PIL/libjpeg applies 4:2:0 chroma subsampling at quality<=90; omitted (4:4:4).

    dh, dw, qt, qit = _device_constants(H, W, int(quality))

    vmem_limit = _vmem_limit_bytes()
    if tb is None:
        tb = _choose_tb(N, H, W, vmem_limit)
    nb = pl.cdiv(N, tb)

    elem = np.dtype(img.dtype).itemsize
    cost = pl.CostEstimate(
        flops=int(12 * N * H * W * (H + W) + 40 * N * H * W),
        transcendentals=0,
        bytes_accessed=int(2 * N * 3 * H * W * elem                 # image in + out (single pass)
                           + (H * H + W * W + 2 * 3 * H * W) * 4))  # constants

    return pl.pallas_call(
        _jpeg_block_kernel,
        out_shape=jax.ShapeDtypeStruct((N, 3, H, W), img.dtype),
        grid_spec=pltpu.PrefetchScalarGridSpec(
            num_scalar_prefetch=0,
            grid=(nb,),                                             # single parallel axis
            in_specs=[
                pl.BlockSpec((tb, 3, H, W), lambda n: (n, 0, 0, 0)),  # RGB block
                pl.BlockSpec((H, H), lambda n: (0, 0)),               # DH  (VMEM-resident)
                pl.BlockSpec((W, W), lambda n: (0, 0)),               # DW  (VMEM-resident)
                pl.BlockSpec((3, H, W), lambda n: (0, 0, 0)),         # quant steps
                pl.BlockSpec((3, H, W), lambda n: (0, 0, 0)),         # reciprocal quant steps
            ],
            out_specs=pl.BlockSpec((tb, 3, H, W), lambda n: (n, 0, 0, 0)),
        ),
        compiler_params=pltpu.CompilerParams(
            dimension_semantics=("parallel",),
            vmem_limit_bytes=vmem_limit),
        cost_estimate=cost,
    )(img, dh, dw, qt, qit)


def _reference(img, quality=QUALITY):
    """Plain-JAX reference of the same lossy JPEG simulation (per-8x8-block einsum)."""
    N, C, H, W = img.shape
    x = img.astype(jnp.float32)
    ycc_off = jnp.asarray(_YCC_OFF).reshape(1, 3, 1, 1)
    ycc = jnp.einsum("kc,nchw->nkhw", jnp.asarray(_RGB2YCC), x) + ycc_off

    D = jnp.asarray(_dct8_matrix())
    ql, qc = _quality_scaled_tables(quality)
    qt = jnp.stack([jnp.asarray(ql), jnp.asarray(qc), jnp.asarray(qc)])  # (3, 8, 8)
    qt_b = qt[None, :, None, :, None, :]

    s = (ycc - 128.0).reshape(N, 3, H // 8, 8, W // 8, 8)
    coef = jnp.einsum("up,vq,ncipjq->nciujv", D, D, s)
    deq = jnp.round(coef * (1.0 / qt_b)) * qt_b
    rec = jnp.einsum("up,vq,nciujv->ncipjq", D, D, deq)
    ycc_rec = jnp.clip(rec.reshape(N, 3, H, W) + 128.0, 0.0, 255.0)

    rgb = jnp.einsum("kc,nchw->nkhw", jnp.asarray(_YCC2RGB), ycc_rec - ycc_off)
    return jnp.clip(jnp.round(rgb), 0.0, 255.0).astype(img.dtype)


if __name__ == "__main__":
    key = jax.random.PRNGKey(0)
    # Small RGB image batch consistent with the module: batch=2, 3 channels, 16x16.
    x = jnp.round(jax.random.uniform(key, (2, 3, 16, 16), dtype=jnp.float32) * 255.0)

    y = apply_jpeg_compression(x, quality=QUALITY)
    y = jax.block_until_ready(y)

    y_ref = _reference(x, quality=QUALITY)
    assert y.shape == x.shape and y.dtype == x.dtype
    diff = jnp.abs(y - y_ref)
    # MXU vs XLA accumulation order can flip jnp.round at quantization half-
    # boundaries (one quant step on an occasional block), so the comparison is
    # tolerant; gross normalization/table errors would blow far past these bounds.
    assert float(jnp.mean(diff)) < 2.0, float(jnp.mean(diff))
    assert float(jnp.max(diff)) < 100.0, float(jnp.max(diff))

    print("KERNEL_OK")
</pallas_src>

<mosaic_0001>
module attributes {stable_mosaic.version = 11 : i64} {
  func.func @_jpeg_block_kernel(%arg0: i32, %arg1: memref<1x3x16x16xf32, #tpu.memory_space<vmem>>, %arg2: memref<16x16xf32, #tpu.memory_space<vmem>>, %arg3: memref<16x16xf32, #tpu.memory_space<vmem>>, %arg4: memref<3x16x16xf32, #tpu.memory_space<vmem>>, %arg5: memref<3x16x16xf32, #tpu.memory_space<vmem>>, %arg6: memref<1x3x16x16xf32, #tpu.memory_space<vmem>>) attributes {dimension_semantics = [#tpu.dimension_semantics<parallel>], iteration_bounds = array<i64: 2>, scalar_prefetch = 0 : i64, scratch_operands = 0 : i64, tpu.core_type = #tpu.core_type<tc>, window_params = [{transform_indices = @transform_0, window_bounds = array<i64: 1, 3, 16, 16>}, {pipeline_mode = #tpu.pipeline_mode<synchronous>, transform_indices = @transform_1, window_bounds = array<i64: 16, 16>}, {pipeline_mode = #tpu.pipeline_mode<synchronous>, transform_indices = @transform_2, window_bounds = array<i64: 16, 16>}, {pipeline_mode = #tpu.pipeline_mode<synchronous>, transform_indices = @transform_3, window_bounds = array<i64: 3, 16, 16>}, {pipeline_mode = #tpu.pipeline_mode<synchronous>, transform_indices = @transform_4, window_bounds = array<i64: 3, 16, 16>}, {transform_indices = @transform_5, window_bounds = array<i64: 1, 3, 16, 16>}]} {
    %c0 = arith.constant 0 : index
    %c0_0 = arith.constant 0 : index
    %0 = vector.load %arg2[%c0, %c0_0] : memref<16x16xf32, #tpu.memory_space<vmem>>, vector<16x16xf32>
    %c0_1 = arith.constant 0 : index
    %c0_2 = arith.constant 0 : index
    %1 = vector.load %arg3[%c0_1, %c0_2] : memref<16x16xf32, #tpu.memory_space<vmem>>, vector<16x16xf32>
    %c0_3 = arith.constant 0 : index
    %c0_4 = arith.constant 0 : index
    %c0_5 = arith.constant 0 : index
    %2 = vector.load %arg4[%c0_3, %c0_4, %c0_5] : memref<3x16x16xf32, #tpu.memory_space<vmem>>, vector<3x16x16xf32>
    %3 = vector.shape_cast %2 : vector<3x16x16xf32> to vector<3x1x16x16xf32>
    %c0_6 = arith.constant 0 : index
    %c0_7 = arith.constant 0 : index
    %c0_8 = arith.constant 0 : index
    %4 = vector.load %arg5[%c0_6, %c0_7, %c0_8] : memref<3x16x16xf32, #tpu.memory_space<vmem>>, vector<3x16x16xf32>
    %5 = vector.shape_cast %4 : vector<3x16x16xf32> to vector<3x1x16x16xf32>
    %c0_9 = arith.constant 0 : index
    %c0_10 = arith.constant 0 : index
    %c0_11 = arith.constant 0 : index
    %c0_12 = arith.constant 0 : index
    %6 = vector.load %arg1[%c0_9, %c0_10, %c0_11, %c0_12] : memref<1x3x16x16xf32, #tpu.memory_space<vmem>>, vector<1x3x16x16xf32>
    %7 = vector.extract_strided_slice %6 {offsets = [0, 0, 0, 0], sizes = [1, 1, 16, 16], strides = [1, 1, 1, 1]} : vector<1x3x16x16xf32> to vector<1x1x16x16xf32>
    %8 = vector.shape_cast %7 : vector<1x1x16x16xf32> to vector<1x16x16xf32>
    %9 = vector.extract_strided_slice %6 {offsets = [0, 1, 0, 0], sizes = [1, 1, 16, 16], strides = [1, 1, 1, 1]} : vector<1x3x16x16xf32> to vector<1x1x16x16xf32>
    %10 = vector.shape_cast %9 : vector<1x1x16x16xf32> to vector<1x16x16xf32>
    %11 = vector.extract_strided_slice %6 {offsets = [0, 2, 0, 0], sizes = [1, 1, 16, 16], strides = [1, 1, 1, 1]} : vector<1x3x16x16xf32> to vector<1x1x16x16xf32>
    %12 = vector.shape_cast %11 : vector<1x1x16x16xf32> to vector<1x16x16xf32>
    %cst = arith.constant 2.990000e-01 : f32
    %13 = vector.broadcast %cst : f32 to vector<1x16x16xf32>
    %14 = arith.mulf %13, %8 : vector<1x16x16xf32>
    %cst_13 = arith.constant 5.870000e-01 : f32
    %15 = vector.broadcast %cst_13 : f32 to vector<1x16x16xf32>
    %16 = arith.mulf %15, %10 : vector<1x16x16xf32>
    %17 = arith.addf %14, %16 : vector<1x16x16xf32>
    %cst_14 = arith.constant 1.140000e-01 : f32
    %18 = vector.broadcast %cst_14 : f32 to vector<1x16x16xf32>
    %19 = arith.mulf %18, %12 : vector<1x16x16xf32>
    %20 = arith.addf %17, %19 : vector<1x16x16xf32>
    %cst_15 = arith.constant 1.280000e+02 : f32
    %21 = vector.broadcast %cst_15 : f32 to vector<1x16x16xf32>
    %22 = arith.subf %20, %21 : vector<1x16x16xf32>
    %cst_16 = arith.constant -1.687360e-01 : f32
    %23 = vector.broadcast %cst_16 : f32 to vector<1x16x16xf32>
    %24 = arith.mulf %23, %8 : vector<1x16x16xf32>
    %cst_17 = arith.constant 3.312640e-01 : f32
    %25 = vector.broadcast %cst_17 : f32 to vector<1x16x16xf32>
    %26 = arith.mulf %25, %10 : vector<1x16x16xf32>
    %27 = arith.subf %24, %26 : vector<1x16x16xf32>
    %cst_18 = arith.constant 5.000000e-01 : f32
    %28 = vector.broadcast %cst_18 : f32 to vector<1x16x16xf32>
    %29 = arith.mulf %28, %12 : vector<1x16x16xf32>
    %30 = arith.addf %27, %29 : vector<1x16x16xf32>
    %cst_19 = arith.constant 5.000000e-01 : f32
    %31 = vector.broadcast %cst_19 : f32 to vector<1x16x16xf32>
    %32 = arith.mulf %31, %8 : vector<1x16x16xf32>
    %cst_20 = arith.constant 4.186880e-01 : f32
    %33 = vector.broadcast %cst_20 : f32 to vector<1x16x16xf32>
    %34 = arith.mulf %33, %10 : vector<1x16x16xf32>
    %35 = arith.subf %32, %34 : vector<1x16x16xf32>
    %cst_21 = arith.constant 8.131200e-02 : f32
    %36 = vector.broadcast %cst_21 : f32 to vector<1x16x16xf32>
    %37 = arith.mulf %36, %12 : vector<1x16x16xf32>
    %38 = arith.subf %35, %37 : vector<1x16x16xf32>
    %39 = tpu.concatenate %22, %30, %38 in 0 : vector<1x16x16xf32>, vector<1x16x16xf32>, vector<1x16x16xf32> -> vector<3x16x16xf32>
    %40 = vector.shape_cast %0 : vector<16x16xf32> to vector<1x16x16xf32>
    %41 = vector.broadcast %40 : vector<1x16x16xf32> to vector<3x16x16xf32>
    %42 = vector.shape_cast %39 : vector<3x16x16xf32> to vector<48x16xf32>
    %cst_22 = arith.constant dense<0.000000e+00> : vector<48x16xf32>
    %43 = tpu.matmul %42, %1, %cst_22 {dimension_numbers = #tpu.dot_dimension_numbers<[1], [1], [0], [0], [0, 0, 1, 0], [], []>} : vector<48x16xf32>, vector<16x16xf32>, vector<48x16xf32> -> vector<48x16xf32>
    %44 = vector.shape_cast %43 : vector<48x16xf32> to vector<3x16x16xf32>
    %cst_23 = arith.constant dense<0.000000e+00> : vector<3x16x16xf32>
    %45 = tpu.matmul %41, %44, %cst_23 {dimension_numbers = #tpu.dot_dimension_numbers<[2], [1], [1], [2], [0, 0, 0, 1, 1, 2], [0], [0]>} : vector<3x16x16xf32>, vector<3x16x16xf32>, vector<3x16x16xf32> -> vector<3x16x16xf32>
    %46 = vector.shape_cast %45 : vector<3x16x16xf32> to vector<3x1x16x16xf32>
    %47 = arith.mulf %46, %5 : vector<3x1x16x16xf32>
    %48 = math.roundeven %47 : vector<3x1x16x16xf32>
    %49 = arith.mulf %48, %3 : vector<3x1x16x16xf32>
    %50 = vector.shape_cast %49 : vector<3x1x16x16xf32> to vector<3x16x16xf32>
    %cst_24 = arith.constant dense<0.000000e+00> : vector<3x16x16xf32>
    %51 = tpu.matmul %41, %50, %cst_24 {dimension_numbers = #tpu.dot_dimension_numbers<[1], [1], [2], [2], [0, 0, 0, 2, 1, 2], [0], [0]>} : vector<3x16x16xf32>, vector<3x16x16xf32>, vector<3x16x16xf32> -> vector<3x16x16xf32>
    %52 = vector.shape_cast %51 : vector<3x16x16xf32> to vector<48x16xf32>
    %cst_25 = arith.constant dense<0.000000e+00> : vector<48x16xf32>
    %53 = tpu.matmul %52, %1, %cst_25 {dimension_numbers = #tpu.dot_dimension_numbers<[1], [0], [0], [1], [0, 0, 1, 1], [], []>} : vector<48x16xf32>, vector<16x16xf32>, vector<48x16xf32> -> vector<48x16xf32>
    %54 = vector.shape_cast %53 : vector<48x16xf32> to vector<3x1x16x16xf32>
    %55 = vector.extract_strided_slice %54 {offsets = [0, 0, 0, 0], sizes = [1, 1, 16, 16], strides = [1, 1, 1, 1]} : vector<3x1x16x16xf32> to vector<1x1x16x16xf32>
    %56 = vector.shape_cast %55 : vector<1x1x16x16xf32> to vector<1x16x16xf32>
    %cst_26 = arith.constant 1.280000e+02 : f32
    %57 = vector.broadcast %cst_26 : f32 to vector<1x16x16xf32>
    %58 = arith.addf %56, %57 : vector<1x16x16xf32>
    %cst_27 = arith.constant 0.000000e+00 : f32
    %cst_28 = arith.constant 2.550000e+02 : f32
    %59 = vector.broadcast %cst_27 : f32 to vector<1x16x16xf32>
    %60 = arith.maximumf %59, %58 : vector<1x16x16xf32>
    %61 = vector.broadcast %cst_28 : f32 to vector<1x16x16xf32>
    %62 = arith.minimumf %61, %60 : vector<1x16x16xf32>
    %63 = vector.extract_strided_slice %54 {offsets = [1, 0, 0, 0], sizes = [1, 1, 16, 16], strides = [1, 1, 1, 1]} : vector<3x1x16x16xf32> to vector<1x1x16x16xf32>
    %64 = vector.shape_cast %63 : vector<1x1x16x16xf32> to vector<1x16x16xf32>
    %cst_29 = arith.constant 1.280000e+02 : f32
    %65 = vector.broadcast %cst_29 : f32 to vector<1x16x16xf32>
    %66 = arith.addf %64, %65 : vector<1x16x16xf32>
    %cst_30 = arith.constant 0.000000e+00 : f32
    %cst_31 = arith.constant 2.550000e+02 : f32
    %67 = vector.broadcast %cst_30 : f32 to vector<1x16x16xf32>
    %68 = arith.maximumf %67, %66 : vector<1x16x16xf32>
    %69 = vector.broadcast %cst_31 : f32 to vector<1x16x16xf32>
    %70 = arith.minimumf %69, %68 : vector<1x16x16xf32>
    %cst_32 = arith.constant 1.280000e+02 : f32
    %71 = vector.broadcast %cst_32 : f32 to vector<1x16x16xf32>
    %72 = arith.subf %70, %71 : vector<1x16x16xf32>
    %73 = vector.extract_strided_slice %54 {offsets = [2, 0, 0, 0], sizes = [1, 1, 16, 16], strides = [1, 1, 1, 1]} : vector<3x1x16x16xf32> to vector<1x1x16x16xf32>
    %74 = vector.shape_cast %73 : vector<1x1x16x16xf32> to vector<1x16x16xf32>
    %cst_33 = arith.constant 1.280000e+02 : f32
    %75 = vector.broadcast %cst_33 : f32 to vector<1x16x16xf32>
    %76 = arith.addf %74, %75 : vector<1x16x16xf32>
    %cst_34 = arith.constant 0.000000e+00 : f32
    %cst_35 = arith.constant 2.550000e+02 : f32
    %77 = vector.broadcast %cst_34 : f32 to vector<1x16x16xf32>
    %78 = arith.maximumf %77, %76 : vector<1x16x16xf32>
    %79 = vector.broadcast %cst_35 : f32 to vector<1x16x16xf32>
    %80 = arith.minimumf %79, %78 : vector<1x16x16xf32>
    %cst_36 = arith.constant 1.280000e+02 : f32
    %81 = vector.broadcast %cst_36 : f32 to vector<1x16x16xf32>
    %82 = arith.subf %80, %81 : vector<1x16x16xf32>
    %cst_37 = arith.constant 1.402000e+00 : f32
    %83 = vector.broadcast %cst_37 : f32 to vector<1x16x16xf32>
    %84 = arith.mulf %83, %82 : vector<1x16x16xf32>
    %85 = arith.addf %62, %84 : vector<1x16x16xf32>
    %cst_38 = arith.constant 3.441360e-01 : f32
    %86 = vector.broadcast %cst_38 : f32 to vector<1x16x16xf32>
    %87 = arith.mulf %86, %72 : vector<1x16x16xf32>
    %88 = arith.subf %62, %87 : vector<1x16x16xf32>
    %cst_39 = arith.constant 7.141360e-01 : f32
    %89 = vector.broadcast %cst_39 : f32 to vector<1x16x16xf32>
    %90 = arith.mulf %89, %82 : vector<1x16x16xf32>
    %91 = arith.subf %88, %90 : vector<1x16x16xf32>
    %cst_40 = arith.constant 1.772000e+00 : f32
    %92 = vector.broadcast %cst_40 : f32 to vector<1x16x16xf32>
    %93 = arith.mulf %92, %72 : vector<1x16x16xf32>
    %94 = arith.addf %62, %93 : vector<1x16x16xf32>
    %95 = vector.shape_cast %85 : vector<1x16x16xf32> to vector<1x1x16x16xf32>
    %96 = vector.shape_cast %91 : vector<1x16x16xf32> to vector<1x1x16x16xf32>
    %97 = vector.shape_cast %94 : vector<1x16x16xf32> to vector<1x1x16x16xf32>
    %98 = tpu.concatenate %95, %96, %97 in 1 : vector<1x1x16x16xf32>, vector<1x1x16x16xf32>, vector<1x1x16x16xf32> -> vector<1x3x16x16xf32>
    %99 = math.roundeven %98 : vector<1x3x16x16xf32>
    %cst_41 = arith.constant 0.000000e+00 : f32
    %cst_42 = arith.constant 2.550000e+02 : f32
    %100 = vector.broadcast %cst_41 : f32 to vector<1x3x16x16xf32>
    %101 = arith.maximumf %100, %99 : vector<1x3x16x16xf32>
    %102 = vector.broadcast %cst_42 : f32 to vector<1x3x16x16xf32>
    %103 = arith.minimumf %102, %101 : vector<1x3x16x16xf32>
    %c0_43 = arith.constant 0 : index
    %c0_44 = arith.constant 0 : index
    %c0_45 = arith.constant 0 : index
    %c0_46 = arith.constant 0 : index
    %104 = vector.load %arg6[%c0_43, %c0_44, %c0_45, %c0_46] : memref<1x3x16x16xf32, #tpu.memory_space<vmem>>, vector<1x3x16x16xf32>
    tpu.vector_store %arg6[%c0_43, %c0_44, %c0_45, %c0_46], %103 {strides = array<i32>} : memref<1x3x16x16xf32, #tpu.memory_space<vmem>>, vector<1x3x16x16xf32>,
    return
  }
  func.func @transform_0(%arg0: i32) -> (i32, i32, i32, i32) {
    %c0_i32 = arith.constant 0 : i32
    %c0_i32_0 = arith.constant 0 : i32
    %c0_i32_1 = arith.constant 0 : i32
    %c0_i32_2 = arith.constant 0 : i32
    return %arg0, %c0_i32, %c0_i32_0, %c0_i32_1 : i32, i32, i32, i32
  }
  func.func @transform_1(%arg0: i32) -> (i32, i32) {
    %c0_i32 = arith.constant 0 : i32
    %c0_i32_0 = arith.constant 0 : i32
    %c0_i32_1 = arith.constant 0 : i32
    return %c0_i32, %c0_i32_0 : i32, i32
  }
  func.func @transform_2(%arg0: i32) -> (i32, i32) {
    %c0_i32 = arith.constant 0 : i32
    %c0_i32_0 = arith.constant 0 : i32
    %c0_i32_1 = arith.constant 0 : i32
    return %c0_i32, %c0_i32_0 : i32, i32
  }
  func.func @transform_3(%arg0: i32) -> (i32, i32, i32) {
    %c0_i32 = arith.constant 0 : i32
    %c0_i32_0 = arith.constant 0 : i32
    %c0_i32_1 = arith.constant 0 : i32
    %c0_i32_2 = arith.constant 0 : i32
    return %c0_i32, %c0_i32_0, %c0_i32_1 : i32, i32, i32
  }
  func.func @transform_4(%arg0: i32) -> (i32, i32, i32) {
    %c0_i32 = arith.constant 0 : i32
    %c0_i32_0 = arith.constant 0 : i32
    %c0_i32_1 = arith.constant 0 : i32
    %c0_i32_2 = arith.constant 0 : i32
    return %c0_i32, %c0_i32_0, %c0_i32_1 : i32, i32, i32
  }
  func.func @transform_5(%arg0: i32) -> (i32, i32, i32, i32) {
    %c0_i32 = arith.constant 0 : i32
    %c0_i32_0 = arith.constant 0 : i32
    %c0_i32_1 = arith.constant 0 : i32
    %c0_i32_2 = arith.constant 0 : i32
    return %arg0, %c0_i32, %c0_i32_0, %c0_i32_1 : i32, i32, i32, i32
  }
}

</mosaic_0001>

<llo_original>
// kernel: tpu_custom_call.1
$region0: #{tpu_custom_call.1}
  #allocation0 [shape = 'u32[]', space=smem, size = 0x4, offset = 0x4, fixed_abs, tag = 'smem constant byte address 0x4 - core index']
  #allocation1 [shape = 'u32[72,128]{1,0:T(1,128)}', space=vmem, size = 0x9000, scoped, tag = 'internal scratch']
  %s0 = inlined_call_operand.hbm [shape: f32[2,3,16,16], index: 0, kind: input, shape index: {}]
  %s1 = inlined_call_operand.hbm [shape: f32[16,16], index: 1, kind: input, shape index: {}]
  %s2 = inlined_call_operand.hbm [shape: f32[16,16], index: 2, kind: input, shape index: {}]
  %s3 = inlined_call_operand.hbm [shape: f32[3,16,16], index: 3, kind: input, shape index: {}]
  %s4 = inlined_call_operand.hbm [shape: f32[3,16,16], index: 4, kind: input, shape index: {}]
  %s5 = inlined_call_operand.hbm [shape: f32[2,3,16,16], index: 5, kind: output, shape index: {}]
  %s6 = sld [smem:[#allocation0]]
  $region73: #{tpu_custom_call.1} parent=0
    _
  %s8 = ssub.s32 1, %s6
  %s9 = scalar_select 0, %s8, %s6
  $region1: #{tpu_custom_call.1} parent=0
    #allocation2 [shape = 'u8[49152]{0}', space=vmem, size = 0xc000, scoped, tag = 'input window, operand 0']
    #allocation3 [shape = 's32[2]{0}', space=sflag, size = 0x8, scoped, tag = 'scoped memory for tpu_custom_call.1']
    #allocation4 [shape = 's32[2]{0}', space=sflag, size = 0x8, scoped, tag = 'scoped memory for tpu_custom_call.1']
    #allocation5 [shape = 'u8[8192]{0}', space=vmem, size = 0x2000, scoped, tag = 'input window, operand 1, single buffered']
    #allocation6 [shape = 's32[1]{0}', space=sflag, size = 0x4, scoped, tag = 'scoped memory for tpu_custom_call.1']
    #allocation7 [shape = 'u8[8192]{0}', space=vmem, size = 0x2000, scoped, tag = 'input window, operand 2, single buffered']
    #allocation8 [shape = 'u8[24576]{0}', space=vmem, size = 0x6000, scoped, tag = 'input window, operand 3, single buffered']
    #allocation9 [shape = 's32[1]{0}', space=sflag, size = 0x4, scoped, tag = 'scoped memory for tpu_custom_call.1']
    #allocation10 [shape = 'u8[24576]{0}', space=vmem, size = 0x6000, scoped, tag = 'input window, operand 4, single buffered']
    #allocation11 [shape = 'u8[49152]{0}', space=vmem, size = 0xc000, scoped, tag = 'output window, operand 0']
    %10 = vsyncpa [#allocation3], 0
    %s11 = scalar_lea.sflag [#allocation3], 1
    %12 = vsyncpa %s11, 0
    %13 = vsyncpa [#allocation6], 0
    %14 = vsyncpa [#allocation9], 0
    %15 = vsyncpa [#allocation4], 0
    %s16 = scalar_lea.sflag [#allocation4], 1
    %17 = vsyncpa %s16, 0
    loop: start=0, step=1, limit=4
    $region2: #{tpu_custom_call.1} parent=1 // loop_pre_header
      _
    $region3: #{tpu_custom_call.1} parent=1 // loop_header
      %s19 = sphi 0, %s23
      %p20 = scmp.ge.s32.totalorder %s19, 4
      %s29 = sphi 0, %s31
      %s32 = sphi 0, %s29
      %s33 = sphi 0, %s32
      %s49 = sphi 0, %s33
      %s53 = sphi 0, %s53
      %s55 = sphi 0, %s53
      %s56 = sphi 0, %s55
      %s70 = sphi 0, %s56
      %s74 = sphi 0, %s74
      %s76 = sphi 0, %s74
      %s77 = sphi 0, %s76
      %s91 = sphi 0, %s77
      %s95 = sphi 0, %s95
      %s97 = sphi 0, %s95
      %s98 = sphi 0, %s97
      %s112 = sphi 0, %s98
      %s116 = sphi 0, %s116
      %s118 = sphi 0, %s116
      %s119 = sphi 0, %s118
      %s133 = sphi 0, %s119
      %s139 = sphi 0, %s141
      %s142 = sphi 0, %s139
      %s143 = sphi 0, %s142
      %s159 = sphi 0, %s143
    $region4: #{tpu_custom_call.1} parent=1 // loop_header_branch
      %22 = sbr.rel (%p20) target = $region8
    $region5: #{tpu_custom_call.1} parent=1 // loop_body
      %s24 = ssub.s32 %s19, 1
      %s25 = ssub.s32 %s19, 2
      %s26 = sadd.s32 %s19, 1
      %s27 = ssub.s32 %s19, %s26
      %p28 = scmp.eq.s32.totalorder %s27, 0
      %s30 = sadd.s32 %s29, 1
      %s31 = scalar_select %p28, %s29, %s30
      %p34 = pneg %p28
      %p35 = scmp.eq.s32.totalorder %s19, 1
      %p36 = por %p34, %p35
      %p37 = scmp.ne.s32.totalorder %s29, %s32
      %p38 = scmp.eq.s32.totalorder %s19, 0
      %p39 = por %p37, %p38
      %p40 = scmp.ne.s32.totalorder %s29, %s32
      %p41 = scmp.eq.s32.totalorder %s24, 1
      %p42 = por %p40, %p41
      %p43 = scmp.ne.s32.totalorder %s32, %s33
      %p44 = scmp.eq.s32.totalorder %s24, 0
      %p45 = por %p43, %p44
      %p46 = scmp.ne.s32.totalorder %s32, %s33
      %p47 = scmp.eq.s32.totalorder %s25, 1
      %p48 = por %p46, %p47
      %p50 = scmp.ne.s32.totalorder %s33, %s49
      %p51 = scmp.eq.s32.totalorder %s25, 0
      %p52 = por %p50, %p51
      %s54 = sadd.s32 %s53, 1
      %p57 = scmp.eq.s32.totalorder %s19, 1
      %p58 = scmp.ne.s32.totalorder %s53, %s55
      %p59 = scmp.eq.s32.totalorder %s19, 0
      %p60 = por %p58, %p59
      %p61 = scmp.ne.s32.totalorder %s53, %s55
      %p62 = scmp.eq.s32.totalorder %s24, 1
      %p63 = por %p61, %p62
      %p64 = scmp.ne.s32.totalorder %s55, %s56
      %p65 = scmp.eq.s32.totalorder %s24, 0
      %p66 = por %p64, %p65
      %p67 = scmp.ne.s32.totalorder %s55, %s56
      %p68 = scmp.eq.s32.totalorder %s25, 1
      %p69 = por %p67, %p68
      %p71 = scmp.ne.s32.totalorder %s56, %s70
      %p72 = scmp.eq.s32.totalorder %s25, 0
      %p73 = por %p71, %p72
      %s75 = sadd.s32 %s74, 1
      %p78 = scmp.eq.s32.totalorder %s19, 1
      %p79 = scmp.ne.s32.totalorder %s74, %s76
      %p80 = scmp.eq.s32.totalorder %s19, 0
      %p81 = por %p79, %p80
      %p82 = scmp.ne.s32.totalorder %s74, %s76
      %p83 = scmp.eq.s32.totalorder %s24, 1
      %p84 = por %p82, %p83
      %p85 = scmp.ne.s32.totalorder %s76, %s77
      %p86 = scmp.eq.s32.totalorder %s24, 0
      %p87 = por %p85, %p86
      %p88 = scmp.ne.s32.totalorder %s76, %s77
      %p89 = scmp.eq.s32.totalorder %s25, 1
      %p90 = por %p88, %p89
      %p92 = scmp.ne.s32.totalorder %s77, %s91
      %p93 = scmp.eq.s32.totalorder %s25, 0
      %p94 = por %p92, %p93
      %s96 = sadd.s32 %s95, 1
      %p99 = scmp.eq.s32.totalorder %s19, 1
      %p100 = scmp.ne.s32.totalorder %s95, %s97
      %p101 = scmp.eq.s32.totalorder %s19, 0
      %p102 = por %p100, %p101
      %p103 = scmp.ne.s32.totalorder %s95, %s97
      %p104 = scmp.eq.s32.totalorder %s24, 1
      %p105 = por %p103, %p104
      %p106 = scmp.ne.s32.totalorder %s97, %s98
      %p107 = scmp.eq.s32.totalorder %s24, 0
      %p108 = por %p106, %p107
      %p109 = scmp.ne.s32.totalorder %s97, %s98
      %p110 = scmp.eq.s32.totalorder %s25, 1
      %p111 = por %p109, %p110
      %p113 = scmp.ne.s32.totalorder %s98, %s112
      %p114 = scmp.eq.s32.totalorder %s25, 0
      %p115 = por %p113, %p114
      %s117 = sadd.s32 %s116, 1
      %p120 = scmp.eq.s32.totalorder %s19, 1
      %p121 = scmp.ne.s32.totalorder %s116, %s118
      %p122 = scmp.eq.s32.totalorder %s19, 0
      %p123 = por %p121, %p122
      %p124 = scmp.ne.s32.totalorder %s116, %s118
      %p125 = scmp.eq.s32.totalorder %s24, 1
      %p126 = por %p124, %p125
      %p127 = scmp.ne.s32.totalorder %s118, %s119
      %p128 = scmp.eq.s32.totalorder %s24, 0
      %p129 = por %p127, %p128
      %p130 = scmp.ne.s32.totalorder %s118, %s119
      %p131 = scmp.eq.s32.totalorder %s25, 1
      %p132 = por %p130, %p131
      %p134 = scmp.ne.s32.totalorder %s119, %s133
      %p135 = scmp.eq.s32.totalorder %s25, 0
      %p136 = por %p134, %p135
      %s137 = ssub.s32 %s19, %s26
      %p138 = scmp.eq.s32.totalorder %s137, 0
      %s140 = sadd.s32 %s139, 1
      %s141 = scalar_select %p138, %s139, %s140
      %p144 = pneg %p138
      %p145 = scmp.eq.s32.totalorder %s19, 1
      %p146 = por %p144, %p145
      %p147 = scmp.ne.s32.totalorder %s139, %s142
      %p148 = scmp.eq.s32.totalorder %s19, 0
      %p149 = por %p147, %p148
      %p150 = scmp.ne.s32.totalorder %s139, %s142
      %p151 = scmp.eq.s32.totalorder %s24, 1
      %p152 = por %p150, %p151
      %p153 = scmp.ne.s32.totalorder %s142, %s143
      %p154 = scmp.eq.s32.totalorder %s24, 0
      %p155 = por %p153, %p154
      %p156 = scmp.ne.s32.totalorder %s142, %s143
      %p157 = scmp.eq.s32.totalorder %s25, 1
      %p158 = por %p156, %p157
      %p160 = scmp.ne.s32.totalorder %s143, %s159
      %p161 = scmp.eq.s32.totalorder %s25, 0
      %p162 = por %p160, %p161
      %p163 = scmp.le.s32.totalorder 1, %s19
      %p164 = scmp.lt.s32.totalorder %s19, 3
      %p165 = pnand %p163, %p164
      %p166 = pneg %p165
      // Predicated region
      $region9: #{tpu_custom_call.1} parent=5 // pred_check
        _
      $region10: #{tpu_custom_call.1} parent=5 // pred_check_branch
        %168 = sbr.rel (%p165) target = $region12
      $region11: #{tpu_custom_call.1} parent=5 // pred_region
        %s169 = ssub.s32 %s19, 1
        // Predicated region
        $region13: #{tpu_custom_call.1} parent=11 // pred_check
          %p170 = pneg %p66
        $region14: #{tpu_custom_call.1} parent=11 // pred_check_branch
          %172 = sbr.rel (%p170) target = $region16
        $region15: #{tpu_custom_call.1} parent=11 // pred_region
          %174 = vsyncadd [#allocation6], 0
          %s175 = sshll.u32 %s1, 4
          %s176 = int_to_ptr.hbm [resolvable:$true] %s175
          %s177 = sshll.u32 [#allocation5], 4
          %s178 = int_to_ptr.vmem [resolvable:$true] %s177
          %183 = dma.hbm_to_vmem [thread:$0]  %s176, 256, %s178, [#allocation6], 128, 128, 8
        $region16: #{tpu_custom_call.1} parent=11 // pred_fallthru
          _
        // Predicated region
        $region17: #{tpu_custom_call.1} parent=11 // pred_check
          %p184 = pneg %p87
        $region18: #{tpu_custom_call.1} parent=11 // pred_check_branch
          %186 = sbr.rel (%p184) target = $region20
        $region19: #{tpu_custom_call.1} parent=11 // pred_region
          %188 = vsyncadd [#allocation6], 0
          %s189 = sshll.u32 %s2, 4
          %s190 = int_to_ptr.hbm [resolvable:$true] %s189
          %s191 = sshll.u32 [#allocation7], 4
          %s192 = int_to_ptr.vmem [resolvable:$true] %s191
          %197 = dma.hbm_to_vmem [thread:$0]  %s190, 256, %s192, [#allocation6], 128, 128, 8
        $region20: #{tpu_custom_call.1} parent=11 // pred_fallthru
          _
        // Predicated region
        $region21: #{tpu_custom_call.1} parent=11 // pred_check
          %p198 = pneg %p108
        $region22: #{tpu_custom_call.1} parent=11 // pred_check_branch
          %200 = sbr.rel (%p198) target = $region24
        $region23: #{tpu_custom_call.1} parent=11 // pred_region
          %202 = vsyncadd [#allocation9], 0
          %s203 = sshll.u32 %s3, 4
          %s204 = int_to_ptr.hbm [resolvable:$true] %s203
          %s205 = sshll.u32 [#allocation8], 4
          %s206 = int_to_ptr.vmem [resolvable:$true] %s205
          %211 = dma.hbm_to_vmem [thread:$0]  %s204, 768, %s206, [#allocation9], 128, 128, 8
        $region24: #{tpu_custom_call.1} parent=11 // pred_fallthru
          _
        // Predicated region
        $region25: #{tpu_custom_call.1} parent=11 // pred_check
          %p212 = pneg %p129
        $region26: #{tpu_custom_call.1} parent=11 // pred_check_branch
          %214 = sbr.rel (%p212) target = $region28
        $region27: #{tpu_custom_call.1} parent=11 // pred_region
          %216 = vsyncadd [#allocation9], 0
          %s217 = sshll.u32 %s4, 4
          %s218 = int_to_ptr.hbm [resolvable:$true] %s217
          %s219 = sshll.u32 [#allocation10], 4
          %s220 = int_to_ptr.vmem [resolvable:$true] %s219
          %225 = dma.hbm_to_vmem [thread:$0]  %s218, 768, %s220, [#allocation9], 128, 128, 8
        $region28: #{tpu_custom_call.1} parent=11 // pred_fallthru
          _
      $region12: #{tpu_custom_call.1} parent=5 // pred_fallthru
        _
      %p226 = scmp.lt.s32.totalorder %s19, 2
      // Predicated region
      $region29: #{tpu_custom_call.1} parent=5 // pred_check
        %p227 = pneg %p226
      $region30: #{tpu_custom_call.1} parent=5 // pred_check_branch
        %229 = sbr.rel (%p227) target = $region32
      $region31: #{tpu_custom_call.1} parent=5 // pred_region
        // Predicated region
        $region33: #{tpu_custom_call.1} parent=31 // pred_check
          %p230 = pneg %p39
        $region34: #{tpu_custom_call.1} parent=31 // pred_check_branch
          %232 = sbr.rel (%p230) target = $region36
        $region35: #{tpu_custom_call.1} parent=31 // pred_region
          %s233 = sand.u32 %s29, 1
          %s234 = scalar_lea.sflag [#allocation3], %s233
          %s235 = sand.u32 %s29, 1
          %s236 = smul.addr %s235, 48
          %s237 = scalar_lea.vmem [#allocation2], %s236
          %239 = vsyncadd %s234, 0
          %s240 = smul.addr %s19, 6
          %s241 = smul.addr %s240, 8
          %s242 = scalar_lea.hbm %s0, %s241
          %s243 = sshll.u32 %s242, 4
          %s244 = int_to_ptr.hbm [resolvable:$true] %s243
          %s245 = sshll.u32 %s237, 4
          %s246 = int_to_ptr.vmem [resolvable:$true] %s245
          %251 = dma.hbm_to_vmem [thread:$0]  %s244, 768, %s246, %s234, 128, 128, 8
        $region36: #{tpu_custom_call.1} parent=31 // pred_fallthru
          _
      $region32: #{tpu_custom_call.1} parent=5 // pred_fallthru
        _
      %p252 = scmp.le.s32.totalorder 1, %s19
      %p253 = scmp.lt.s32.totalorder %s19, 3
      %p254 = pnand %p252, %p253
      %p255 = pneg %p254
      // Predicated region
      $region37: #{tpu_custom_call.1} parent=5 // pred_check
        _
      $region38: #{tpu_custom_call.1} parent=5 // pred_check_branch
        %257 = sbr.rel (%p254) target = $region40
      $region39: #{tpu_custom_call.1} parent=5 // pred_region
        %s258 = ssub.s32 %s19, 1
        %s259 = sand.u32 %s32, 1
        %s260 = scalar_lea.sflag [#allocation3], %s259
        %s261 = sand.u32 %s32, 1
        %s262 = smul.addr %s261, 48
        %s263 = scalar_lea.vmem [#allocation2], %s262
        // Predicated region
        $region41: #{tpu_custom_call.1} parent=39 // pred_check
          %p264 = pneg %p45
        $region42: #{tpu_custom_call.1} parent=39 // pred_check_branch
          %266 = sbr.rel (%p264) target = $region44
        $region43: #{tpu_custom_call.1} parent=39 // pred_region
          %268 = dma.done %s260, 768
        $region44: #{tpu_custom_call.1} parent=39 // pred_fallthru
          _
        // Predicated region
        $region45: #{tpu_custom_call.1} parent=39 // pred_check
          %p269 = pneg %p66
        $region46: #{tpu_custom_call.1} parent=39 // pred_check_branch
          %271 = sbr.rel (%p269) target = $region48
        $region47: #{tpu_custom_call.1} parent=39 // pred_region
          %273 = dma.done [#allocation6], 256
        $region48: #{tpu_custom_call.1} parent=39 // pred_fallthru
          _
        // Predicated region
        $region49: #{tpu_custom_call.1} parent=39 // pred_check
          %p274 = pneg %p87
        $region50: #{tpu_custom_call.1} parent=39 // pred_check_branch
          %276 = sbr.rel (%p274) target = $region52
        $region51: #{tpu_custom_call.1} parent=39 // pred_region
          %278 = dma.done [#allocation6], 256
        $region52: #{tpu_custom_call.1} parent=39 // pred_fallthru
          _
        // Predicated region
        $region53: #{tpu_custom_call.1} parent=39 // pred_check
          %p279 = pneg %p108
        $region54: #{tpu_custom_call.1} parent=39 // pred_check_branch
          %281 = sbr.rel (%p279) target = $region56
        $region55: #{tpu_custom_call.1} parent=39 // pred_region
          %283 = dma.done [#allocation9], 768
        $region56: #{tpu_custom_call.1} parent=39 // pred_fallthru
          _
        // Predicated region
        $region57: #{tpu_custom_call.1} parent=39 // pred_check
          %p284 = pneg %p129
        $region58: #{tpu_custom_call.1} parent=39 // pred_check_branch
          %286 = sbr.rel (%p284) target = $region60
        $region59: #{tpu_custom_call.1} parent=39 // pred_region
          %288 = dma.done [#allocation9], 768
        $region60: #{tpu_custom_call.1} parent=39 // pred_fallthru
          _
        %s289 = sand.u32 %s32, 1
        %s290 = scalar_lea.sflag [#allocation3], %s289
        %s291 = sand.u32 %s32, 1
        %s292 = smul.addr %s291, 48
        %s293 = scalar_lea.vmem [#allocation2], %s292
        %p294 = pneg %p45
        %p295 = pneg %p42
        %p296 = pneg %p66
        %p297 = pneg %p63
        %p298 = pneg %p87
        %p299 = pneg %p84
        %p300 = pneg %p108
        %p301 = pneg %p105
        %p302 = pneg %p129
        %p303 = pneg %p126
        %p304 = pneg %p155
        %p305 = pneg %p152
        %s306 = sand.u32 %s142, 1
        %s307 = scalar_lea.sflag [#allocation4], %s306
        %s308 = sand.u32 %s142, 1
        %s309 = smul.addr %s308, 48
        %s310 = scalar_lea.vmem [#allocation11], %s309
        %v311 = vld [vmem:[#allocation5] sm:$0xff]
        %v312 = vld [vmem:[#allocation5 + $0x8] sm:$0xff]
        %v313 = vld [vmem:[#allocation7] sm:$0xff]
        %v314 = vld [vmem:[#allocation7 + $0x8] sm:$0xff]
        %v315 = vld [vmem:[#allocation8] sm:$0xff]
        %v316 = vld [vmem:[#allocation8 + $0x8] sm:$0xff]
        %v317 = vld [vmem:[#allocation8 + $0x10] sm:$0xff]
        %v318 = vld [vmem:[#allocation8 + $0x18] sm:$0xff]
        %v319 = vld [vmem:[#allocation8 + $0x20] sm:$0xff]
        %v320 = vld [vmem:[#allocation8 + $0x28] sm:$0xff]
        %v321 = vld [vmem:[#allocation10] sm:$0xff]
        %v322 = vld [vmem:[#allocation10 + $0x8] sm:$0xff]
        %v323 = vld [vmem:[#allocation10 + $0x10] sm:$0xff]
        %v324 = vld [vmem:[#allocation10 + $0x18] sm:$0xff]
        %v325 = vld [vmem:[#allocation10 + $0x20] sm:$0xff]
        %v326 = vld [vmem:[#allocation10 + $0x28] sm:$0xff]
        %v327 = vld [vmem:[%s263] sm:$0xff]
        %v328 = vld [vmem:[%s263 + $0x8] sm:$0xff]
        %v329 = vld [vmem:[%s263 + $0x10] sm:$0xff]
        %v330 = vld [vmem:[%s263 + $0x18] sm:$0xff]
        %v331 = vld [vmem:[%s263 + $0x20] sm:$0xff]
        %v332 = vld [vmem:[%s263 + $0x28] sm:$0xff]
        %v333 = vmul.f32 %v327, 0.299
        %v334 = vmul.f32 %v328, 0.299
        %v335 = vmul.f32 %v329, 0.587
        %v336 = vmul.f32 %v330, 0.587
        %v337 = vadd.f32 %v333, %v335
        %v338 = vadd.f32 %v334, %v336
        %v339 = vmul.f32 %v331, 0.114
        %v340 = vmul.f32 %v332, 0.114
        %v341 = vadd.f32 %v337, %v339
        %v342 = vadd.f32 %v338, %v340
        %v343 = vsub.f32 %v341, 128.0
        %v344 = vsub.f32 %v342, 128.0
        %v345 = vmul.f32 %v327, -0.168736
        %v346 = vmul.f32 %v328, -0.168736
        %v347 = vmul.f32 %v329, 0.331264
        %v348 = vmul.f32 %v330, 0.331264
        %v349 = vsub.f32 %v345, %v347
        %v350 = vsub.f32 %v346, %v348
        %v351 = vmul.f32 %v331, 0.5
        %v352 = vmul.f32 %v332, 0.5
        %v353 = vadd.f32 %v349, %v351
        %v354 = vadd.f32 %v350, %v352
        %v355 = vmul.f32 %v327, 0.5
        %v356 = vmul.f32 %v328, 0.5
        %v357 = vmul.f32 %v329, 0.418688
        %v358 = vmul.f32 %v330, 0.418688
        %v359 = vsub.f32 %v355, %v357
        %v360 = vsub.f32 %v356, %v358
        %v361 = vmul.f32 %v331, 0.081312
        %v362 = vmul.f32 %v332, 0.081312
        %v363 = vsub.f32 %v359, %v361
        %v364 = vsub.f32 %v360, %v362
        %vm365 = vcmask 130048
        %v367 = vsel %vm365, %v343, 0
        %v370 = vsel %vm365, %v344, 0
        %v373 = vsel %vm365, %v353, 0
        %v376 = vsel %vm365, %v354, 0
        %v379 = vsel %vm365, %v363, 0
        %v382 = vsel %vm365, %v364, 0
        %v385 = vsel %vm365, %v313, 0
        %v388 = vsel %vm365, %v314, 0
        %390 = vmatpush.xpose.msra.mxu0 0.0
        %391 = vmatpush.xpose.msra.mxu0 0.0
        %392 = vmatpush.xpose.msra.mxu0 0.0
        %393 = vmatpush.xpose.msra.mxu0 0.0
        %394 = vmatpush.xpose.msra.mxu0 0.0
        %395 = vmatpush.xpose.msra.mxu0 0.0
        %396 = vmatpush.xpose.msra.mxu0 0.0
        %397 = vmatpush.xpose.msra.mxu0 0.0
        %398 = vmatpush.xpose.msra.mxu0 0.0
        %399 = vmatpush.xpose.msra.mxu0 0.0
        %400 = vmatpush.xpose.msra.mxu0 0.0
        %401 = vmatpush.xpose.msra.mxu0 0.0
        %402 = vmatpush.xpose.msra.mxu0 0.0
        %403 = vmatpush.xpose.msra.mxu0 0.0
        %404 = vmatpush.xpose.msra.mxu0 %v388
        %405 = vmatpush.xpose.msra.mxu0 %v385
        %406 = vmatmul.f32.gmra.mxu0 %v367
        %v407 = vpop.f32.mrf.mxu0
        %v408 = vadd.f32 0.0, %v407
        %409 = vmatmul.f32.gmra.mxu0 %v370
        %v410 = vpop.f32.mrf.mxu0
        %v411 = vadd.f32 0.0, %v410
        %412 = vmatmul.f32.gmra.mxu0 %v373
        %v413 = vpop.f32.mrf.mxu0
        %v414 = vadd.f32 0.0, %v413
        %415 = vmatmul.f32.gmra.mxu0 %v376
        %v416 = vpop.f32.mrf.mxu0
        %v417 = vadd.f32 0.0, %v416
        %418 = vmatmul.f32.gmra.mxu0 %v379
        %v419 = vpop.f32.mrf.mxu0
        %v420 = vadd.f32 0.0, %v419
        %421 = vmatmul.f32.gmra.mxu0 %v382
        %v422 = vpop.f32.mrf.mxu0
        %v423 = vadd.f32 0.0, %v422
        %424 = vdwg.mxu0
        %v426 = vsel %vm365, %v311, 0
        %v429 = vsel %vm365, %v312, 0
        %431 = vmatpush.msra.mxu0 0.0
        %432 = vmatpush.msra.mxu0 0.0
        %433 = vmatpush.msra.mxu0 0.0
        %434 = vmatpush.msra.mxu0 0.0
        %435 = vmatpush.msra.mxu0 0.0
        %436 = vmatpush.msra.mxu0 0.0
        %437 = vmatpush.msra.mxu0 0.0
        %438 = vmatpush.msra.mxu0 0.0
        %439 = vmatpush.msra.mxu0 0.0
        %440 = vmatpush.msra.mxu0 0.0
        %441 = vmatpush.msra.mxu0 0.0
        %442 = vmatpush.msra.mxu0 0.0
        %443 = vmatpush.msra.mxu0 0.0
        %444 = vmatpush.msra.mxu0 0.0
        %445 = vmatpush.msra.mxu0 %v411
        %446 = vmatpush.msra.mxu0 %v408
        %447 = vmatmul.f32.gmra.mxu0 %v426
        %v448 = vpop.f32.mrf.mxu0
        %v449 = vadd.f32 0.0, %v448
        %450 = vmatmul.f32.gmra.mxu0 %v429
        %v451 = vpop.f32.mrf.mxu0
        %v452 = vadd.f32 0.0, %v451
        %453 = vdwg.mxu0
        %454 = vmatpush.msra.mxu0 0.0
        %455 = vmatpush.msra.mxu0 0.0
        %456 = vmatpush.msra.mxu0 0.0
        %457 = vmatpush.msra.mxu0 0.0
        %458 = vmatpush.msra.mxu0 0.0
        %459 = vmatpush.msra.mxu0 0.0
        %460 = vmatpush.msra.mxu0 0.0
        %461 = vmatpush.msra.mxu0 0.0
        %462 = vmatpush.msra.mxu0 0.0
        %463 = vmatpush.msra.mxu0 0.0
        %464 = vmatpush.msra.mxu0 0.0
        %465 = vmatpush.msra.mxu0 0.0
        %466 = vmatpush.msra.mxu0 0.0
        %467 = vmatpush.msra.mxu0 0.0
        %468 = vmatpush.msra.mxu0 %v417
        %469 = vmatpush.msra.mxu0 %v414
        %470 = vmatmul.f32.gmra.mxu0 %v426
        %v471 = vpop.f32.mrf.mxu0
        %v472 = vadd.f32 0.0, %v471
        %473 = vmatmul.f32.gmra.mxu0 %v429
        %v474 = vpop.f32.mrf.mxu0
        %v475 = vadd.f32 0.0, %v474
        %476 = vdwg.mxu0
        %477 = vmatpush.msra.mxu0 0.0
        %478 = vmatpush.msra.mxu0 0.0
        %479 = vmatpush.msra.mxu0 0.0
        %480 = vmatpush.msra.mxu0 0.0
        %481 = vmatpush.msra.mxu0 0.0
        %482 = vmatpush.msra.mxu0 0.0
        %483 = vmatpush.msra.mxu0 0.0
        %484 = vmatpush.msra.mxu0 0.0
        %485 = vmatpush.msra.mxu0 0.0
        %486 = vmatpush.msra.mxu0 0.0
        %487 = vmatpush.msra.mxu0 0.0
        %488 = vmatpush.msra.mxu0 0.0
        %489 = vmatpush.msra.mxu0 0.0
        %490 = vmatpush.msra.mxu0 0.0
        %491 = vmatpush.msra.mxu0 %v423
        %492 = vmatpush.msra.mxu0 %v420
        %493 = vmatmul.f32.gmra.mxu0 %v426
        %v494 = vpop.f32.mrf.mxu0
        %v495 = vadd.f32 0.0, %v494
        %496 = vmatmul.f32.gmra.mxu0 %v429
        %v497 = vpop.f32.mrf.mxu0
        %v498 = vadd.f32 0.0, %v497
        %499 = vdwg.mxu0
        %v500 = vmul.f32 %v449, %v321
        %v501 = vmul.f32 %v452, %v322
        %v502 = vmul.f32 %v472, %v323
        %v503 = vmul.f32 %v475, %v324
        %v504 = vmul.f32 %v495, %v325
        %v505 = vmul.f32 %v498, %v326
        %v506 = vround.ne.pseudo %v500
        %v507 = vround.ne.pseudo %v501
        %v508 = vround.ne.pseudo %v502
        %v509 = vround.ne.pseudo %v503
        %v510 = vround.ne.pseudo %v504
        %v511 = vround.ne.pseudo %v505
        %v512 = vmul.f32 %v506, %v315
        %v513 = vmul.f32 %v507, %v316
        %v514 = vmul.f32 %v508, %v317
        %v515 = vmul.f32 %v509, %v318
        %v516 = vmul.f32 %v510, %v319
        %v517 = vmul.f32 %v511, %v320
        %518 = vxpose.xlu0.b32.start [1/16] %v311, 128
        %519 = vxpose.xlu0.b32.cont [2/16] %v312, 128
        %520 = vxpose.xlu0.b32.cont [3/16] 0.0, 128
        %521 = vxpose.xlu0.b32.cont [4/16] 0.0, 128
        %522 = vxpose.xlu0.b32.cont [5/16] 0.0, 128
        %523 = vxpose.xlu0.b32.cont [6/16] 0.0, 128
        %524 = vxpose.xlu0.b32.cont [7/16] 0.0, 128
        %525 = vxpose.xlu0.b32.cont [8/16] 0.0, 128
        %526 = vxpose.xlu0.b32.cont [9/16] 0.0, 128
        %527 = vxpose.xlu0.b32.cont [10/16] 0.0, 128
        %528 = vxpose.xlu0.b32.cont [11/16] 0.0, 128
        %529 = vxpose.xlu0.b32.cont [12/16] 0.0, 128
        %530 = vxpose.xlu0.b32.cont [13/16] 0.0, 128
        %531 = vxpose.xlu0.b32.cont [14/16] 0.0, 128
        %532 = vxpose.xlu0.b32.cont [15/16] 0.0, 128
        %533 = vxpose.xlu0.b32.end [16/16] 0.0, 128
        %v534 = vpop.trf.xlu0
        %v535 = vpop.trf.xlu0
        %v536 = vpop.trf.xlu0
        %v537 = vpop.trf.xlu0
        %v538 = vpop.trf.xlu0
        %v539 = vpop.trf.xlu0
        %v540 = vpop.trf.xlu0
        %v541 = vpop.trf.xlu0
        %v542 = vpop.trf.xlu0
        %v543 = vpop.trf.xlu0
        %v544 = vpop.trf.xlu0
        %v545 = vpop.trf.xlu0
        %v546 = vpop.trf.xlu0
        %v547 = vpop.trf.xlu0
        %v548 = vpop.trf.xlu0
        %v549 = vpop.trf.xlu0
        %v551 = vsel %vm365, %v534, 0
        %v554 = vsel %vm365, %v535, 0
        %556 = vmatpush.msra.mxu0 0.0
        %557 = vmatpush.msra.mxu0 0.0
        %558 = vmatpush.msra.mxu0 0.0
        %559 = vmatpush.msra.mxu0 0.0
        %560 = vmatpush.msra.mxu0 0.0
        %561 = vmatpush.msra.mxu0 0.0
        %562 = vmatpush.msra.mxu0 0.0
        %563 = vmatpush.msra.mxu0 0.0
        %564 = vmatpush.msra.mxu0 0.0
        %565 = vmatpush.msra.mxu0 0.0
        %566 = vmatpush.msra.mxu0 0.0
        %567 = vmatpush.msra.mxu0 0.0
        %568 = vmatpush.msra.mxu0 0.0
        %569 = vmatpush.msra.mxu0 0.0
        %570 = vmatpush.msra.mxu0 %v513
        %571 = vmatpush.msra.mxu0 %v512
        %572 = vmatmul.f32.gmra.mxu0 %v551
        %v573 = vpop.f32.mrf.mxu0
        %v574 = vadd.f32 0.0, %v573
        %575 = vmatmul.f32.gmra.mxu0 %v554
        %v576 = vpop.f32.mrf.mxu0
        %v577 = vadd.f32 0.0, %v576
        %578 = vdwg.mxu0
        %579 = vmatpush.msra.mxu0 0.0
        %580 = vmatpush.msra.mxu0 0.0
        %581 = vmatpush.msra.mxu0 0.0
        %582 = vmatpush.msra.mxu0 0.0
        %583 = vmatpush.msra.mxu0 0.0
        %584 = vmatpush.msra.mxu0 0.0
        %585 = vmatpush.msra.mxu0 0.0
        %586 = vmatpush.msra.mxu0 0.0
        %587 = vmatpush.msra.mxu0 0.0
        %588 = vmatpush.msra.mxu0 0.0
        %589 = vmatpush.msra.mxu0 0.0
        %590 = vmatpush.msra.mxu0 0.0
        %591 = vmatpush.msra.mxu0 0.0
        %592 = vmatpush.msra.mxu0 0.0
        %593 = vmatpush.msra.mxu0 %v515
        %594 = vmatpush.msra.mxu0 %v514
        %595 = vmatmul.f32.gmra.mxu0 %v551
        %v596 = vpop.f32.mrf.mxu0
        %v597 = vadd.f32 0.0, %v596
        %598 = vmatmul.f32.gmra.mxu0 %v554
        %v599 = vpop.f32.mrf.mxu0
        %v600 = vadd.f32 0.0, %v599
        %601 = vdwg.mxu0
        %602 = vmatpush.msra.mxu0 0.0
        %603 = vmatpush.msra.mxu0 0.0
        %604 = vmatpush.msra.mxu0 0.0
        %605 = vmatpush.msra.mxu0 0.0
        %606 = vmatpush.msra.mxu0 0.0
        %607 = vmatpush.msra.mxu0 0.0
        %608 = vmatpush.msra.mxu0 0.0
        %609 = vmatpush.msra.mxu0 0.0
        %610 = vmatpush.msra.mxu0 0.0
        %611 = vmatpush.msra.mxu0 0.0
        %612 = vmatpush.msra.mxu0 0.0
        %613 = vmatpush.msra.mxu0 0.0
        %614 = vmatpush.msra.mxu0 0.0
        %615 = vmatpush.msra.mxu0 0.0
        %616 = vmatpush.msra.mxu0 %v517
        %617 = vmatpush.msra.mxu0 %v516
        %618 = vmatmul.f32.gmra.mxu0 %v551
        %v619 = vpop.f32.mrf.mxu0
        %v620 = vadd.f32 0.0, %v619
        %621 = vmatmul.f32.gmra.mxu0 %v554
        %v622 = vpop.f32.mrf.mxu0
        %v623 = vadd.f32 0.0, %v622
        %624 = vdwg.mxu0
        %v626 = vsel %vm365, %v574, 0
        %v629 = vsel %vm365, %v577, 0
        %v632 = vsel %vm365, %v597, 0
        %v635 = vsel %vm365, %v600, 0
        %v638 = vsel %vm365, %v620, 0
        %v641 = vsel %vm365, %v623, 0
        %643 = vmatpush.msra.mxu0 0.0
        %644 = vmatpush.msra.mxu0 0.0
        %645 = vmatpush.msra.mxu0 0.0
        %646 = vmatpush.msra.mxu0 0.0
        %647 = vmatpush.msra.mxu0 0.0
        %648 = vmatpush.msra.mxu0 0.0
        %649 = vmatpush.msra.mxu0 0.0
        %650 = vmatpush.msra.mxu0 0.0
        %651 = vmatpush.msra.mxu0 0.0
        %652 = vmatpush.msra.mxu0 0.0
        %653 = vmatpush.msra.mxu0 0.0
        %654 = vmatpush.msra.mxu0 0.0
        %655 = vmatpush.msra.mxu0 0.0
        %656 = vmatpush.msra.mxu0 0.0
        %657 = vmatpush.msra.mxu0 %v314
        %658 = vmatpush.msra.mxu0 %v313
        %659 = vmatmul.f32.gmra.mxu0 %v626
        %v660 = vpop.f32.mrf.mxu0
        %v661 = vadd.f32 0.0, %v660
        %662 = vmatmul.f32.gmra.mxu0 %v629
        %v663 = vpop.f32.mrf.mxu0
        %v664 = vadd.f32 0.0, %v663
        %665 = vmatmul.f32.gmra.mxu0 %v632
        %v666 = vpop.f32.mrf.mxu0
        %v667 = vadd.f32 0.0, %v666
        %668 = vmatmul.f32.gmra.mxu0 %v635
        %v669 = vpop.f32.mrf.mxu0
        %v670 = vadd.f32 0.0, %v669
        %671 = vmatmul.f32.gmra.mxu0 %v638
        %v672 = vpop.f32.mrf.mxu0
        %v673 = vadd.f32 0.0, %v672
        %674 = vmatmul.f32.gmra.mxu0 %v641
        %v675 = vpop.f32.mrf.mxu0
        %v676 = vadd.f32 0.0, %v675
        %677 = vdwg.mxu0
        %v678 = vadd.f32 %v661, 128.0
        %v679 = vadd.f32 %v664, 128.0
        %v680 = vmax.f32 %v678, 0.0
        %v681 = vmax.f32 %v679, 0.0
        %v682 = vmin.f32 %v680, 255.0
        %v683 = vmin.f32 %v681, 255.0
        %v684 = vadd.f32 %v667, 128.0
        %v685 = vadd.f32 %v670, 128.0
        %v686 = vmax.f32 %v684, 0.0
        %v687 = vmax.f32 %v685, 0.0
        %v688 = vmin.f32 %v686, 255.0
        %v689 = vmin.f32 %v687, 255.0
        %v690 = vsub.f32 %v688, 128.0
        %v691 = vsub.f32 %v689, 128.0
        %v692 = vadd.f32 %v673, 128.0
        %v693 = vadd.f32 %v676, 128.0
        %v694 = vmax.f32 %v692, 0.0
        %v695 = vmax.f32 %v693, 0.0
        %v696 = vmin.f32 %v694, 255.0
        %v697 = vmin.f32 %v695, 255.0
        %v698 = vsub.f32 %v696, 128.0
        %v699 = vsub.f32 %v697, 128.0
        %v700 = vmul.f32 %v698, 1.402
        %v701 = vmul.f32 %v699, 1.402
        %v702 = vadd.f32 %v682, %v700
        %v703 = vadd.f32 %v683, %v701
        %v704 = vmul.f32 %v690, 0.344136
        %v705 = vmul.f32 %v691, 0.344136
        %v706 = vsub.f32 %v682, %v704
        %v707 = vsub.f32 %v683, %v705
        %v708 = vmul.f32 %v698, 0.714136
        %v709 = vmul.f32 %v699, 0.714136
        %v710 = vsub.f32 %v706, %v708
        %v711 = vsub.f32 %v707, %v709
        %v712 = vmul.f32 %v690, 1.772
        %v713 = vmul.f32 %v691, 1.772
        %v714 = vadd.f32 %v682, %v712
        %v715 = vadd.f32 %v683, %v713
        %v716 = vround.ne.pseudo %v702
        %v717 = vround.ne.pseudo %v703
        %v718 = vround.ne.pseudo %v710
        %v719 = vround.ne.pseudo %v711
        %v720 = vround.ne.pseudo %v714
        %v721 = vround.ne.pseudo %v715
        %v722 = vmax.f32 %v716, 0.0
        %v723 = vmax.f32 %v717, 0.0
        %v724 = vmax.f32 %v718, 0.0
        %v725 = vmax.f32 %v719, 0.0
        %v726 = vmax.f32 %v720, 0.0
        %v727 = vmax.f32 %v721, 0.0
        %v728 = vmin.f32 %v722, 255.0
        %v729 = vmin.f32 %v723, 255.0
        %v730 = vmin.f32 %v724, 255.0
        %v731 = vmin.f32 %v725, 255.0
        %v732 = vmin.f32 %v726, 255.0
        %v733 = vmin.f32 %v727, 255.0
        %734 = vst.msk [vmem:[%s310] sm:$0xff] %vm365, %v728
        %735 = vst.msk [vmem:[%s310 + $0x8] sm:$0xff] %vm365, %v729
        %736 = vst.msk [vmem:[%s310 + $0x10] sm:$0xff] %vm365, %v730
        %737 = vst.msk [vmem:[%s310 + $0x18] sm:$0xff] %vm365, %v731
        %738 = vst.msk [vmem:[%s310 + $0x20] sm:$0xff] %vm365, %v732
        %739 = vst.msk [vmem:[%s310 + $0x28] sm:$0xff] %vm365, %v733
        %s740 = sand.u32 %s142, 1
        %s741 = scalar_lea.sflag [#allocation4], %s740
        %s742 = sand.u32 %s142, 1
        %s743 = smul.addr %s742, 48
        %s744 = scalar_lea.vmem [#allocation11], %s743
        // Predicated region
        $region61: #{tpu_custom_call.1} parent=39 // pred_check
          %p745 = pneg %p152
        $region62: #{tpu_custom_call.1} parent=39 // pred_check_branch
          %747 = sbr.rel (%p745) target = $region64
        $region63: #{tpu_custom_call.1} parent=39 // pred_region
          %749 = vsyncadd %s741, 0
          %s750 = smul.addr %s24, 6
          %s751 = smul.addr %s750, 8
          %s752 = scalar_lea.hbm %s5, %s751
          %s753 = sshll.u32 %s744, 4
          %s754 = int_to_ptr.vmem [resolvable:$true] %s753
          %s755 = sshll.u32 %s752, 4
          %s756 = int_to_ptr.hbm [resolvable:$true] %s755
          %761 = dma.vmem_to_hbm [thread:$0]  %s754, 768, %s756, %s741, 128, 128, 8
        $region64: #{tpu_custom_call.1} parent=39 // pred_fallthru
          _
      $region40: #{tpu_custom_call.1} parent=5 // pred_fallthru
        _
      %p762 = scmp.le.s32.totalorder 2, %s19
      // Predicated region
      $region65: #{tpu_custom_call.1} parent=5 // pred_check
        %p763 = pneg %p762
      $region66: #{tpu_custom_call.1} parent=5 // pred_check_branch
        %765 = sbr.rel (%p763) target = $region68
      $region67: #{tpu_custom_call.1} parent=5 // pred_region
        %s766 = ssub.s32 %s19, 2
        // Predicated region
        $region69: #{tpu_custom_call.1} parent=67 // pred_check
          %p767 = pneg %p158
        $region70: #{tpu_custom_call.1} parent=67 // pred_check_branch
          %769 = sbr.rel (%p767) target = $region72
        $region71: #{tpu_custom_call.1} parent=67 // pred_region
          %s770 = sand.u32 %s143, 1
          %s771 = scalar_lea.sflag [#allocation4], %s770
          %s772 = sand.u32 %s143, 1
          %s773 = smul.addr %s772, 48
          %s774 = scalar_lea.vmem [#allocation11], %s773
          %776 = dma.done %s771, 768
        $region72: #{tpu_custom_call.1} parent=67 // pred_fallthru
          _
      $region68: #{tpu_custom_call.1} parent=5 // pred_fallthru
        _
    $region6: #{tpu_custom_call.1} parent=1 // loop_footer
      %s23 = sadd.s32 1, %s19
    $region7: #{tpu_custom_call.1} parent=1 // loop_footer_branch
      %18 = sbr.rel target = $region3
    $region8: #{tpu_custom_call.1} parent=1 // loop_exit
      _
    %777 = vsyncpa [#allocation3], 1
    %s778 = scalar_lea.sflag [#allocation3], 1
    %779 = vsyncpa %s778, 1
    %780 = vsyncpa [#allocation6], 1
    %781 = vsyncpa [#allocation9], 1
    %782 = vsyncpa [#allocation4], 1
    %s783 = scalar_lea.sflag [#allocation4], 1
    %784 = vsyncpa %s783, 1

</llo_original>
